<compile_context>
chip_gen: v6e
topology: v6e:2x2x1
jax: 0.10.0
libtpu: 0.0.40
codegen_flags: <defaults>
</compile_context>

<pallas_src>
import jax
import jax.numpy as jnp
from jax.experimental import pallas as pl
from jax.experimental.pallas import tpu as pltpu

LN_EPS = 1e-5
MAX_ROW_TILE = 512   # keep h/y intermediates comfortably inside vregs/VMEM


# ----------------------------------------------------------------------------
# Kernel: fused 3-layer MLP (ReLU, ReLU, identity) + LayerNorm for one row tile.
# ----------------------------------------------------------------------------
def _mlp_ln_kernel(x_ref,                  # (TM, D_IN)   f32
                   w1_ref, b1_ref,         # (D_IN, H)    bf16 , (1, H)     f32
                   w2_ref, b2_ref,         # (H, H)       bf16 , (1, H)     f32
                   w3_ref, b3_ref,         # (H, D_OUT)   bf16 , (1, D_OUT) f32
                   gamma_ref, beta_ref,    # (1, D_OUT)   f32
                   o_ref):                 # (TM, D_OUT)  f32
    # bf16 operands on the MXU, f32 accumulation; cast happens in-kernel so the
    # HBM read stays a single f32 pass with no wrapper-side conversion copy.
    x = x_ref[...].astype(jnp.bfloat16)
    h = jnp.dot(x, w1_ref[...], preferred_element_type=jnp.float32)
    h = jnp.maximum(h + b1_ref[...], 0.0)

    h = jnp.dot(h.astype(jnp.bfloat16), w2_ref[...],
                preferred_element_type=jnp.float32)
    h = jnp.maximum(h + b2_ref[...], 0.0)

    y = jnp.dot(h.astype(jnp.bfloat16), w3_ref[...],
                preferred_element_type=jnp.float32)
    y = y + b3_ref[...]

    # LayerNorm over the real (unpadded) feature axis -- no masking machinery.
    mu = jnp.mean(y, axis=-1, keepdims=True)
    d = y - mu
    var = jnp.mean(d * d, axis=-1, keepdims=True)
    inv = jax.lax.rsqrt(var + LN_EPS)
    o_ref[...] = (d * inv * gamma_ref[...] + beta_ref[...]).astype(o_ref.dtype)


# ----------------------------------------------------------------------------
# Per-branch wrapper: one pallas_call over that branch's real rows only.
# ----------------------------------------------------------------------------
def _branch_forward(params, v):
    (w1, b1), (w2, b2), (w3, b3), (gamma, beta) = params
    rows, d_in = v.shape
    h = w1.shape[1]
    d_out = w3.shape[1]

    # Row tiling: a single full-extent block for small inputs (block dims equal
    # the full array dims, so no (8,128) divisibility requirement); 512-row
    # tiles at scale (ragged last block handled by Pallas).
    tm = rows if rows <= MAX_ROW_TILE else MAX_ROW_TILE
    grid = (pl.cdiv(rows, tm),)

    # Weights in bf16 (tiny, reused across all row tiles); epilogue params f32.
    w1b = w1.astype(jnp.bfloat16)
    w2b = w2.astype(jnp.bfloat16)
    w3b = w3.astype(jnp.bfloat16)
    b1r = b1.reshape(1, h).astype(jnp.float32)
    b2r = b2.reshape(1, h).astype(jnp.float32)
    b3r = b3.reshape(1, d_out).astype(jnp.float32)
    gr = gamma.reshape(1, d_out).astype(jnp.float32)
    br = beta.reshape(1, d_out).astype(jnp.float32)

    row_map = lambda i: (i, 0)      # x / output tiles advance with the grid
    const_map = lambda i: (0, 0)    # constant index -> weights DMA'd once, resident

    grid_spec = pltpu.PrefetchScalarGridSpec(
        num_scalar_prefetch=0,
        grid=grid,
        in_specs=[
            pl.BlockSpec((tm, d_in), row_map),
            pl.BlockSpec((d_in, h), const_map),
            pl.BlockSpec((1, h), const_map),
            pl.BlockSpec((h, h), const_map),
            pl.BlockSpec((1, h), const_map),
            pl.BlockSpec((h, d_out), const_map),
            pl.BlockSpec((1, d_out), const_map),
            pl.BlockSpec((1, d_out), const_map),
            pl.BlockSpec((1, d_out), const_map),
        ],
        out_specs=pl.BlockSpec((tm, d_out), row_map),
    )

    # Per-iteration working set (Pallas double-buffers every operand) + headroom;
    # well under v7x's 64 MiB physical VMEM even at tm = 512.
    block_bytes = (tm * d_in * 4 + tm * d_out * 4
                   + (d_in * h + h * h + h * d_out) * 2
                   + (2 * h + 3 * d_out) * 4)
    vmem_limit = int(min(max(4 * block_bytes + (8 << 20), 16 << 20), 64 << 20))

    flops = 2 * rows * (d_in * h + h * h + h * d_out)
    bytes_accessed = int(rows * d_in * 4 + rows * d_out * 4
                         + (d_in * h + h * h + h * d_out) * 2
                         + (2 * h + 3 * d_out) * 4)
    cost = pl.CostEstimate(flops=flops, transcendentals=rows,
                           bytes_accessed=bytes_accessed)

    return pl.pallas_call(
        _mlp_ln_kernel,
        grid_spec=grid_spec,
        out_shape=jax.ShapeDtypeStruct((rows, d_out), jnp.float32),
        compiler_params=pltpu.CompilerParams(
            dimension_semantics=("parallel",),
            vmem_limit_bytes=vmem_limit),
        cost_estimate=cost,
    )(v, w1b, b1r, w2b, b2r, w3b, b3r, gr, br)


@jax.jit
def encoder_forward(node_params, edge_params, x, edge_index, e_features):
    del edge_index  # unused by the reference forward pass; kept for signature parity
    return (_branch_forward(node_params, x),
            _branch_forward(edge_params, e_features))


# ----------------------------------------------------------------------------
# Parameter init (mimics PyTorch nn.Linear default) and plain-JAX reference.
# ----------------------------------------------------------------------------
def _init_linear(key, fan_in, fan_out):
    kw, kb = jax.random.split(key)
    bound = 1.0 / jnp.sqrt(jnp.float32(fan_in))
    w = jax.random.uniform(kw, (fan_in, fan_out), jnp.float32, -bound, bound)
    b = jax.random.uniform(kb, (fan_out,), jnp.float32, -bound, bound)
    return w, b


def make_encoder_params(key, node_in, node_out, edge_in, edge_out,
                        mlp_num_layers, mlp_hidden_dim):
    # TODO(synk): kernel is unrolled for mlp_num_layers == 2 hidden layers.
    assert mlp_num_layers == 2, "kernel is unrolled for 2 hidden layers"
    keys = jax.random.split(key, 6)
    node_params = (
        _init_linear(keys[0], node_in, mlp_hidden_dim),
        _init_linear(keys[1], mlp_hidden_dim, mlp_hidden_dim),
        _init_linear(keys[2], mlp_hidden_dim, node_out),
        (jnp.ones((node_out,), jnp.float32), jnp.zeros((node_out,), jnp.float32)),
    )
    edge_params = (
        _init_linear(keys[3], edge_in, mlp_hidden_dim),
        _init_linear(keys[4], mlp_hidden_dim, mlp_hidden_dim),
        _init_linear(keys[5], mlp_hidden_dim, edge_out),
        (jnp.ones((edge_out,), jnp.float32), jnp.zeros((edge_out,), jnp.float32)),
    )
    return node_params, edge_params


def _reference_forward(node_params, edge_params, x, e_features):
    """Plain-JAX reference matching the kernel's bf16-operand / f32-accum precision."""
    def mm(a, w):
        return jnp.dot(a.astype(jnp.bfloat16), w.astype(jnp.bfloat16),
                       preferred_element_type=jnp.float32)

    def branch(v, params):
        (w1, b1), (w2, b2), (w3, b3), (g, bt) = params
        h = jnp.maximum(mm(v, w1) + b1, 0.0)
        h = jnp.maximum(mm(h, w2) + b2, 0.0)
        y = mm(h, w3) + b3
        mu = jnp.mean(y, axis=-1, keepdims=True)
        var = jnp.mean((y - mu) ** 2, axis=-1, keepdims=True)
        return (y - mu) * jax.lax.rsqrt(var + LN_EPS) * g + bt

    return branch(x, node_params), branch(e_features, edge_params)


if __name__ == "__main__":
    # Small, forward-consistent shapes.
    node_in, node_out = 16, 32
    edge_in, edge_out = 8, 32
    mlp_num_layers, mlp_hidden_dim = 2, 32
    n_nodes, n_edges = 8, 16

    key = jax.random.PRNGKey(0)
    kp, kx, ke = jax.random.split(key, 3)

    node_params, edge_params = make_encoder_params(
        kp, node_in, node_out, edge_in, edge_out, mlp_num_layers, mlp_hidden_dim)

    x = jax.random.normal(kx, (n_nodes, node_in), jnp.float32)
    e_features = jax.random.normal(ke, (n_edges, edge_in), jnp.float32)
    edge_index = jnp.zeros((2, n_edges), jnp.int32)  # unused in forward

    node_y, edge_y = encoder_forward(node_params, edge_params, x, edge_index, e_features)
    jax.block_until_ready((node_y, edge_y))

    ref_node, ref_edge = _reference_forward(node_params, edge_params, x, e_features)
    assert node_y.shape == (n_nodes, node_out) and edge_y.shape == (n_edges, edge_out)
    assert jnp.allclose(node_y, ref_node, atol=2e-3, rtol=2e-3)
    assert jnp.allclose(edge_y, ref_edge, atol=2e-3, rtol=2e-3)

    print("KERNEL_OK")
</pallas_src>

<mosaic_0001>
module attributes {stable_mosaic.version = 11 : i64} {
  func.func @_mlp_ln_kernel(%arg0: i32, %arg1: memref<8x16xf32, #tpu.memory_space<vmem>>, %arg2: memref<16x32xbf16, #tpu.memory_space<vmem>>, %arg3: memref<1x32xf32, #tpu.memory_space<vmem>>, %arg4: memref<32x32xbf16, #tpu.memory_space<vmem>>, %arg5: memref<1x32xf32, #tpu.memory_space<vmem>>, %arg6: memref<32x32xbf16, #tpu.memory_space<vmem>>, %arg7: memref<1x32xf32, #tpu.memory_space<vmem>>, %arg8: memref<1x32xf32, #tpu.memory_space<vmem>>, %arg9: memref<1x32xf32, #tpu.memory_space<vmem>>, %arg10: memref<8x32xf32, #tpu.memory_space<vmem>>) attributes {dimension_semantics = [#tpu.dimension_semantics<parallel>], iteration_bounds = array<i64: 1>, scalar_prefetch = 0 : i64, scratch_operands = 0 : i64, tpu.core_type = #tpu.core_type<tc>, window_params = [{transform_indices = @transform_0, window_bounds = array<i64: 8, 16>}, {pipeline_mode = #tpu.pipeline_mode<synchronous>, transform_indices = @transform_1, window_bounds = array<i64: 16, 32>}, {pipeline_mode = #tpu.pipeline_mode<synchronous>, transform_indices = @transform_2, window_bounds = array<i64: 1, 32>}, {pipeline_mode = #tpu.pipeline_mode<synchronous>, transform_indices = @transform_3, window_bounds = array<i64: 32, 32>}, {pipeline_mode = #tpu.pipeline_mode<synchronous>, transform_indices = @transform_4, window_bounds = array<i64: 1, 32>}, {pipeline_mode = #tpu.pipeline_mode<synchronous>, transform_indices = @transform_5, window_bounds = array<i64: 32, 32>}, {pipeline_mode = #tpu.pipeline_mode<synchronous>, transform_indices = @transform_6, window_bounds = array<i64: 1, 32>}, {pipeline_mode = #tpu.pipeline_mode<synchronous>, transform_indices = @transform_7, window_bounds = array<i64: 1, 32>}, {pipeline_mode = #tpu.pipeline_mode<synchronous>, transform_indices = @transform_8, window_bounds = array<i64: 1, 32>}, {transform_indices = @transform_9, window_bounds = array<i64: 8, 32>}]} {
    %c0 = arith.constant 0 : index
    %c0_0 = arith.constant 0 : index
    %0 = vector.load %arg1[%c0, %c0_0] : memref<8x16xf32, #tpu.memory_space<vmem>>, vector<8x16xf32>
    %1 = arith.truncf %0 : vector<8x16xf32> to vector<8x16xbf16>
    %c0_1 = arith.constant 0 : index
    %c0_2 = arith.constant 0 : index
    %2 = vector.load %arg2[%c0_1, %c0_2] : memref<16x32xbf16, #tpu.memory_space<vmem>>, vector<16x32xbf16>
    %cst = arith.constant dense<0.000000e+00> : vector<8x32xf32>
    %3 = tpu.matmul %1, %2, %cst {dimension_numbers = #tpu.dot_dimension_numbers<[1], [0], [0], [1], [0, 0, 1, 1], [], []>} : vector<8x16xbf16>, vector<16x32xbf16>, vector<8x32xf32> -> vector<8x32xf32>
    %c0_3 = arith.constant 0 : index
    %c0_4 = arith.constant 0 : index
    %4 = vector.load %arg3[%c0_3, %c0_4] : memref<1x32xf32, #tpu.memory_space<vmem>>, vector<1x32xf32>
    %5 = vector.broadcast %4 : vector<1x32xf32> to vector<8x32xf32>
    %6 = arith.addf %3, %5 : vector<8x32xf32>
    %cst_5 = arith.constant 0.000000e+00 : f32
    %7 = vector.broadcast %cst_5 : f32 to vector<8x32xf32>
    %8 = arith.maximumf %6, %7 : vector<8x32xf32>
    %9 = arith.truncf %8 : vector<8x32xf32> to vector<8x32xbf16>
    %c0_6 = arith.constant 0 : index
    %c0_7 = arith.constant 0 : index
    %10 = vector.load %arg4[%c0_6, %c0_7] : memref<32x32xbf16, #tpu.memory_space<vmem>>, vector<32x32xbf16>
    %cst_8 = arith.constant dense<0.000000e+00> : vector<8x32xf32>
    %11 = tpu.matmul %9, %10, %cst_8 {dimension_numbers = #tpu.dot_dimension_numbers<[1], [0], [0], [1], [0, 0, 1, 1], [], []>} : vector<8x32xbf16>, vector<32x32xbf16>, vector<8x32xf32> -> vector<8x32xf32>
    %c0_9 = arith.constant 0 : index
    %c0_10 = arith.constant 0 : index
    %12 = vector.load %arg5[%c0_9, %c0_10] : memref<1x32xf32, #tpu.memory_space<vmem>>, vector<1x32xf32>
    %13 = vector.broadcast %12 : vector<1x32xf32> to vector<8x32xf32>
    %14 = arith.addf %11, %13 : vector<8x32xf32>
    %cst_11 = arith.constant 0.000000e+00 : f32
    %15 = vector.broadcast %cst_11 : f32 to vector<8x32xf32>
    %16 = arith.maximumf %14, %15 : vector<8x32xf32>
    %17 = arith.truncf %16 : vector<8x32xf32> to vector<8x32xbf16>
    %c0_12 = arith.constant 0 : index
    %c0_13 = arith.constant 0 : index
    %18 = vector.load %arg6[%c0_12, %c0_13] : memref<32x32xbf16, #tpu.memory_space<vmem>>, vector<32x32xbf16>
    %cst_14 = arith.constant dense<0.000000e+00> : vector<8x32xf32>
    %19 = tpu.matmul %17, %18, %cst_14 {dimension_numbers = #tpu.dot_dimension_numbers<[1], [0], [0], [1], [0, 0, 1, 1], [], []>} : vector<8x32xbf16>, vector<32x32xbf16>, vector<8x32xf32> -> vector<8x32xf32>
    %c0_15 = arith.constant 0 : index
    %c0_16 = arith.constant 0 : index
    %20 = vector.load %arg7[%c0_15, %c0_16] : memref<1x32xf32, #tpu.memory_space<vmem>>, vector<1x32xf32>
    %21 = vector.broadcast %20 : vector<1x32xf32> to vector<8x32xf32>
    %22 = arith.addf %19, %21 : vector<8x32xf32>
    %cst_17 = arith.constant dense<0.000000e+00> : vector<8xf32>
    %23 = vector.multi_reduction <add>, %22, %cst_17 [1] : vector<8x32xf32> to vector<8xf32>
    %24 = vector.shape_cast %23 : vector<8xf32> to vector<8x1xf32>
    %cst_18 = arith.constant 3.200000e+01 : f32
    %25 = vector.broadcast %cst_18 : f32 to vector<8x1xf32>
    %26 = arith.divf %24, %25 : vector<8x1xf32>
    %27 = vector.broadcast %26 : vector<8x1xf32> to vector<8x32xf32>
    %28 = arith.subf %22, %27 : vector<8x32xf32>
    %29 = arith.mulf %28, %28 : vector<8x32xf32>
    %cst_19 = arith.constant dense<0.000000e+00> : vector<8xf32>
    %30 = vector.multi_reduction <add>, %29, %cst_19 [1] : vector<8x32xf32> to vector<8xf32>
    %31 = vector.shape_cast %30 : vector<8xf32> to vector<8x1xf32>
    %cst_20 = arith.constant 3.200000e+01 : f32
    %32 = vector.broadcast %cst_20 : f32 to vector<8x1xf32>
    %33 = arith.divf %31, %32 : vector<8x1xf32>
    %cst_21 = arith.constant 9.99999974E-6 : f32
    %34 = vector.broadcast %cst_21 : f32 to vector<8x1xf32>
    %35 = arith.addf %33, %34 : vector<8x1xf32>
    %36 = math.rsqrt %35 : vector<8x1xf32>
    %37 = vector.broadcast %36 : vector<8x1xf32> to vector<8x32xf32>
    %38 = arith.mulf %28, %37 : vector<8x32xf32>
    %c0_22 = arith.constant 0 : index
    %c0_23 = arith.constant 0 : index
    %39 = vector.load %arg8[%c0_22, %c0_23] : memref<1x32xf32, #tpu.memory_space<vmem>>, vector<1x32xf32>
    %40 = vector.broadcast %39 : vector<1x32xf32> to vector<8x32xf32>
    %41 = arith.mulf %38, %40 : vector<8x32xf32>
    %c0_24 = arith.constant 0 : index
    %c0_25 = arith.constant 0 : index
    %42 = vector.load %arg9[%c0_24, %c0_25] : memref<1x32xf32, #tpu.memory_space<vmem>>, vector<1x32xf32>
    %43 = vector.broadcast %42 : vector<1x32xf32> to vector<8x32xf32>
    %44 = arith.addf %41, %43 : vector<8x32xf32>
    %c0_26 = arith.constant 0 : index
    %c0_27 = arith.constant 0 : index
    %45 = vector.load %arg10[%c0_26, %c0_27] : memref<8x32xf32, #tpu.memory_space<vmem>>, vector<8x32xf32>
    tpu.vector_store %arg10[%c0_26, %c0_27], %44 {strides = array<i32>} : memref<8x32xf32, #tpu.memory_space<vmem>>, vector<8x32xf32>,
    return
  }
  func.func @transform_0(%arg0: i32) -> (i32, i32) {
    %c0_i32 = arith.constant 0 : i32
    %c0_i32_0 = arith.constant 0 : i32
    return %arg0, %c0_i32 : i32, i32
  }
  func.func @transform_1(%arg0: i32) -> (i32, i32) {
    %c0_i32 = arith.constant 0 : i32
    %c0_i32_0 = arith.constant 0 : i32
    %c0_i32_1 = arith.constant 0 : i32
    return %c0_i32, %c0_i32_0 : i32, i32
  }
  func.func @transform_2(%arg0: i32) -> (i32, i32) {
    %c0_i32 = arith.constant 0 : i32
    %c0_i32_0 = arith.constant 0 : i32
    %c0_i32_1 = arith.constant 0 : i32
    return %c0_i32, %c0_i32_0 : i32, i32
  }
  func.func @transform_3(%arg0: i32) -> (i32, i32) {
    %c0_i32 = arith.constant 0 : i32
    %c0_i32_0 = arith.constant 0 : i32
    %c0_i32_1 = arith.constant 0 : i32
    return %c0_i32, %c0_i32_0 : i32, i32
  }
  func.func @transform_4(%arg0: i32) -> (i32, i32) {
    %c0_i32 = arith.constant 0 : i32
    %c0_i32_0 = arith.constant 0 : i32
    %c0_i32_1 = arith.constant 0 : i32
    return %c0_i32, %c0_i32_0 : i32, i32
  }
  func.func @transform_5(%arg0: i32) -> (i32, i32) {
    %c0_i32 = arith.constant 0 : i32
    %c0_i32_0 = arith.constant 0 : i32
    %c0_i32_1 = arith.constant 0 : i32
    return %c0_i32, %c0_i32_0 : i32, i32
  }
  func.func @transform_6(%arg0: i32) -> (i32, i32) {
    %c0_i32 = arith.constant 0 : i32
    %c0_i32_0 = arith.constant 0 : i32
    %c0_i32_1 = arith.constant 0 : i32
    return %c0_i32, %c0_i32_0 : i32, i32
  }
  func.func @transform_7(%arg0: i32) -> (i32, i32) {
    %c0_i32 = arith.constant 0 : i32
    %c0_i32_0 = arith.constant 0 : i32
    %c0_i32_1 = arith.constant 0 : i32
    return %c0_i32, %c0_i32_0 : i32, i32
  }
  func.func @transform_8(%arg0: i32) -> (i32, i32) {
    %c0_i32 = arith.constant 0 : i32
    %c0_i32_0 = arith.constant 0 : i32
    %c0_i32_1 = arith.constant 0 : i32
    return %c0_i32, %c0_i32_0 : i32, i32
  }
  func.func @transform_9(%arg0: i32) -> (i32, i32) {
    %c0_i32 = arith.constant 0 : i32
    %c0_i32_0 = arith.constant 0 : i32
    return %arg0, %c0_i32 : i32, i32
  }
}

module attributes {stable_mosaic.version = 11 : i64} {
  func.func @_mlp_ln_kernel(%arg0: i32, %arg1: memref<16x8xf32, #tpu.memory_space<vmem>>, %arg2: memref<8x32xbf16, #tpu.memory_space<vmem>>, %arg3: memref<1x32xf32, #tpu.memory_space<vmem>>, %arg4: memref<32x32xbf16, #tpu.memory_space<vmem>>, %arg5: memref<1x32xf32, #tpu.memory_space<vmem>>, %arg6: memref<32x32xbf16, #tpu.memory_space<vmem>>, %arg7: memref<1x32xf32, #tpu.memory_space<vmem>>, %arg8: memref<1x32xf32, #tpu.memory_space<vmem>>, %arg9: memref<1x32xf32, #tpu.memory_space<vmem>>, %arg10: memref<16x32xf32, #tpu.memory_space<vmem>>) attributes {dimension_semantics = [#tpu.dimension_semantics<parallel>], iteration_bounds = array<i64: 1>, scalar_prefetch = 0 : i64, scratch_operands = 0 : i64, tpu.core_type = #tpu.core_type<tc>, window_params = [{transform_indices = @transform_0, window_bounds = array<i64: 16, 8>}, {pipeline_mode = #tpu.pipeline_mode<synchronous>, transform_indices = @transform_1, window_bounds = array<i64: 8, 32>}, {pipeline_mode = #tpu.pipeline_mode<synchronous>, transform_indices = @transform_2, window_bounds = array<i64: 1, 32>}, {pipeline_mode = #tpu.pipeline_mode<synchronous>, transform_indices = @transform_3, window_bounds = array<i64: 32, 32>}, {pipeline_mode = #tpu.pipeline_mode<synchronous>, transform_indices = @transform_4, window_bounds = array<i64: 1, 32>}, {pipeline_mode = #tpu.pipeline_mode<synchronous>, transform_indices = @transform_5, window_bounds = array<i64: 32, 32>}, {pipeline_mode = #tpu.pipeline_mode<synchronous>, transform_indices = @transform_6, window_bounds = array<i64: 1, 32>}, {pipeline_mode = #tpu.pipeline_mode<synchronous>, transform_indices = @transform_7, window_bounds = array<i64: 1, 32>}, {pipeline_mode = #tpu.pipeline_mode<synchronous>, transform_indices = @transform_8, window_bounds = array<i64: 1, 32>}, {transform_indices = @transform_9, window_bounds = array<i64: 16, 32>}]} {
    %c0 = arith.constant 0 : index
    %c0_0 = arith.constant 0 : index
    %0 = vector.load %arg1[%c0, %c0_0] : memref<16x8xf32, #tpu.memory_space<vmem>>, vector<16x8xf32>
    %1 = arith.truncf %0 : vector<16x8xf32> to vector<16x8xbf16>
    %c0_1 = arith.constant 0 : index
    %c0_2 = arith.constant 0 : index
    %2 = vector.load %arg2[%c0_1, %c0_2] : memref<8x32xbf16, #tpu.memory_space<vmem>>, vector<8x32xbf16>
    %cst = arith.constant dense<0.000000e+00> : vector<16x32xf32>
    %3 = tpu.matmul %1, %2, %cst {dimension_numbers = #tpu.dot_dimension_numbers<[1], [0], [0], [1], [0, 0, 1, 1], [], []>} : vector<16x8xbf16>, vector<8x32xbf16>, vector<16x32xf32> -> vector<16x32xf32>
    %c0_3 = arith.constant 0 : index
    %c0_4 = arith.constant 0 : index
    %4 = vector.load %arg3[%c0_3, %c0_4] : memref<1x32xf32, #tpu.memory_space<vmem>>, vector<1x32xf32>
    %5 = vector.broadcast %4 : vector<1x32xf32> to vector<16x32xf32>
    %6 = arith.addf %3, %5 : vector<16x32xf32>
    %cst_5 = arith.constant 0.000000e+00 : f32
    %7 = vector.broadcast %cst_5 : f32 to vector<16x32xf32>
    %8 = arith.maximumf %6, %7 : vector<16x32xf32>
    %9 = arith.truncf %8 : vector<16x32xf32> to vector<16x32xbf16>
    %c0_6 = arith.constant 0 : index
    %c0_7 = arith.constant 0 : index
    %10 = vector.load %arg4[%c0_6, %c0_7] : memref<32x32xbf16, #tpu.memory_space<vmem>>, vector<32x32xbf16>
    %cst_8 = arith.constant dense<0.000000e+00> : vector<16x32xf32>
    %11 = tpu.matmul %9, %10, %cst_8 {dimension_numbers = #tpu.dot_dimension_numbers<[1], [0], [0], [1], [0, 0, 1, 1], [], []>} : vector<16x32xbf16>, vector<32x32xbf16>, vector<16x32xf32> -> vector<16x32xf32>
    %c0_9 = arith.constant 0 : index
    %c0_10 = arith.constant 0 : index
    %12 = vector.load %arg5[%c0_9, %c0_10] : memref<1x32xf32, #tpu.memory_space<vmem>>, vector<1x32xf32>
    %13 = vector.broadcast %12 : vector<1x32xf32> to vector<16x32xf32>
    %14 = arith.addf %11, %13 : vector<16x32xf32>
    %cst_11 = arith.constant 0.000000e+00 : f32
    %15 = vector.broadcast %cst_11 : f32 to vector<16x32xf32>
    %16 = arith.maximumf %14, %15 : vector<16x32xf32>
    %17 = arith.truncf %16 : vector<16x32xf32> to vector<16x32xbf16>
    %c0_12 = arith.constant 0 : index
    %c0_13 = arith.constant 0 : index
    %18 = vector.load %arg6[%c0_12, %c0_13] : memref<32x32xbf16, #tpu.memory_space<vmem>>, vector<32x32xbf16>
    %cst_14 = arith.constant dense<0.000000e+00> : vector<16x32xf32>
    %19 = tpu.matmul %17, %18, %cst_14 {dimension_numbers = #tpu.dot_dimension_numbers<[1], [0], [0], [1], [0, 0, 1, 1], [], []>} : vector<16x32xbf16>, vector<32x32xbf16>, vector<16x32xf32> -> vector<16x32xf32>
    %c0_15 = arith.constant 0 : index
    %c0_16 = arith.constant 0 : index
    %20 = vector.load %arg7[%c0_15, %c0_16] : memref<1x32xf32, #tpu.memory_space<vmem>>, vector<1x32xf32>
    %21 = vector.broadcast %20 : vector<1x32xf32> to vector<16x32xf32>
    %22 = arith.addf %19, %21 : vector<16x32xf32>
    %cst_17 = arith.constant dense<0.000000e+00> : vector<16xf32>
    %23 = vector.multi_reduction <add>, %22, %cst_17 [1] : vector<16x32xf32> to vector<16xf32>
    %24 = vector.shape_cast %23 : vector<16xf32> to vector<16x1xf32>
    %cst_18 = arith.constant 3.200000e+01 : f32
    %25 = vector.broadcast %cst_18 : f32 to vector<16x1xf32>
    %26 = arith.divf %24, %25 : vector<16x1xf32>
    %27 = vector.broadcast %26 : vector<16x1xf32> to vector<16x32xf32>
    %28 = arith.subf %22, %27 : vector<16x32xf32>
    %29 = arith.mulf %28, %28 : vector<16x32xf32>
    %cst_19 = arith.constant dense<0.000000e+00> : vector<16xf32>
    %30 = vector.multi_reduction <add>, %29, %cst_19 [1] : vector<16x32xf32> to vector<16xf32>
    %31 = vector.shape_cast %30 : vector<16xf32> to vector<16x1xf32>
    %cst_20 = arith.constant 3.200000e+01 : f32
    %32 = vector.broadcast %cst_20 : f32 to vector<16x1xf32>
    %33 = arith.divf %31, %32 : vector<16x1xf32>
    %cst_21 = arith.constant 9.99999974E-6 : f32
    %34 = vector.broadcast %cst_21 : f32 to vector<16x1xf32>
    %35 = arith.addf %33, %34 : vector<16x1xf32>
    %36 = math.rsqrt %35 : vector<16x1xf32>
    %37 = vector.broadcast %36 : vector<16x1xf32> to vector<16x32xf32>
    %38 = arith.mulf %28, %37 : vector<16x32xf32>
    %c0_22 = arith.constant 0 : index
    %c0_23 = arith.constant 0 : index
    %39 = vector.load %arg8[%c0_22, %c0_23] : memref<1x32xf32, #tpu.memory_space<vmem>>, vector<1x32xf32>
    %40 = vector.broadcast %39 : vector<1x32xf32> to vector<16x32xf32>
    %41 = arith.mulf %38, %40 : vector<16x32xf32>
    %c0_24 = arith.constant 0 : index
    %c0_25 = arith.constant 0 : index
    %42 = vector.load %arg9[%c0_24, %c0_25] : memref<1x32xf32, #tpu.memory_space<vmem>>, vector<1x32xf32>
    %43 = vector.broadcast %42 : vector<1x32xf32> to vector<16x32xf32>
    %44 = arith.addf %41, %43 : vector<16x32xf32>
    %c0_26 = arith.constant 0 : index
    %c0_27 = arith.constant 0 : index
    %45 = vector.load %arg10[%c0_26, %c0_27] : memref<16x32xf32, #tpu.memory_space<vmem>>, vector<16x32xf32>
    tpu.vector_store %arg10[%c0_26, %c0_27], %44 {strides = array<i32>} : memref<16x32xf32, #tpu.memory_space<vmem>>, vector<16x32xf32>,
    return
  }
  func.func @transform_0(%arg0: i32) -> (i32, i32) {
    %c0_i32 = arith.constant 0 : i32
    %c0_i32_0 = arith.constant 0 : i32
    return %arg0, %c0_i32 : i32, i32
  }
  func.func @transform_1(%arg0: i32) -> (i32, i32) {
    %c0_i32 = arith.constant 0 : i32
    %c0_i32_0 = arith.constant 0 : i32
    %c0_i32_1 = arith.constant 0 : i32
    return %c0_i32, %c0_i32_0 : i32, i32
  }
  func.func @transform_2(%arg0: i32) -> (i32, i32) {
    %c0_i32 = arith.constant 0 : i32
    %c0_i32_0 = arith.constant 0 : i32
    %c0_i32_1 = arith.constant 0 : i32
    return %c0_i32, %c0_i32_0 : i32, i32
  }
  func.func @transform_3(%arg0: i32) -> (i32, i32) {
    %c0_i32 = arith.constant 0 : i32
    %c0_i32_0 = arith.constant 0 : i32
    %c0_i32_1 = arith.constant 0 : i32
    return %c0_i32, %c0_i32_0 : i32, i32
  }
  func.func @transform_4(%arg0: i32) -> (i32, i32) {
    %c0_i32 = arith.constant 0 : i32
    %c0_i32_0 = arith.constant 0 : i32
    %c0_i32_1 = arith.constant 0 : i32
    return %c0_i32, %c0_i32_0 : i32, i32
  }
  func.func @transform_5(%arg0: i32) -> (i32, i32) {
    %c0_i32 = arith.constant 0 : i32
    %c0_i32_0 = arith.constant 0 : i32
    %c0_i32_1 = arith.constant 0 : i32
    return %c0_i32, %c0_i32_0 : i32, i32
  }
  func.func @transform_6(%arg0: i32) -> (i32, i32) {
    %c0_i32 = arith.constant 0 : i32
    %c0_i32_0 = arith.constant 0 : i32
    %c0_i32_1 = arith.constant 0 : i32
    return %c0_i32, %c0_i32_0 : i32, i32
  }
  func.func @transform_7(%arg0: i32) -> (i32, i32) {
    %c0_i32 = arith.constant 0 : i32
    %c0_i32_0 = arith.constant 0 : i32
    %c0_i32_1 = arith.constant 0 : i32
    return %c0_i32, %c0_i32_0 : i32, i32
  }
  func.func @transform_8(%arg0: i32) -> (i32, i32) {
    %c0_i32 = arith.constant 0 : i32
    %c0_i32_0 = arith.constant 0 : i32
    %c0_i32_1 = arith.constant 0 : i32
    return %c0_i32, %c0_i32_0 : i32, i32
  }
  func.func @transform_9(%arg0: i32) -> (i32, i32) {
    %c0_i32 = arith.constant 0 : i32
    %c0_i32_0 = arith.constant 0 : i32
    return %arg0, %c0_i32 : i32, i32
  }
}

</mosaic_0001>

<llo_original>
// kernel: encoder_forward.2
$region0: #{encoder_forward.2}
  #allocation0 [shape = 'u32[]', space=smem, size = 0x4, offset = 0x4, fixed_abs, tag = 'smem constant byte address 0x4 - core index']
  #allocation1 [shape = 'u32[144,128]{1,0:T(1,128)}', space=vmem, size = 0x12000, scoped, tag = 'internal scratch']
  %s0 = inlined_call_operand.vmem [shape: f32[8,16], index: 0, kind: input, shape index: {}]
  %s1 = inlined_call_operand.vmem [shape: bf16[16,32], index: 1, kind: input, shape index: {}]
  %s2 = inlined_call_operand.vmem [shape: f32[1,32], index: 2, kind: input, shape index: {}]
  %s3 = inlined_call_operand.vmem [shape: bf16[32,32], index: 3, kind: input, shape index: {}]
  %s4 = inlined_call_operand.vmem [shape: f32[1,32], index: 4, kind: input, shape index: {}]
  %s5 = inlined_call_operand.vmem [shape: bf16[32,32], index: 5, kind: input, shape index: {}]
  %s6 = inlined_call_operand.vmem [shape: f32[1,32], index: 6, kind: input, shape index: {}]
  %s7 = inlined_call_operand.vmem [shape: f32[1,32], index: 7, kind: input, shape index: {}]
  %s8 = inlined_call_operand.vmem [shape: f32[1,32], index: 8, kind: input, shape index: {}]
  %s9 = inlined_call_operand.hbm [shape: f32[8,32], index: 9, kind: output, shape index: {}]
  %s10 = sld [smem:[#allocation0]]
  $region46: #{encoder_forward.2} parent=0
    _
  %s12 = ssub.s32 1, %s10
  %s13 = scalar_select 0, %s12, %s10
  $region1: #{encoder_forward.2} parent=0
    #allocation2 [shape = 'u8[4096]{0}', space=vmem, size = 0x1000, scoped, tag = 'output window, operand 0, single buffered']
    #allocation3 [shape = 's32[1]{0}', space=sflag, size = 0x4, scoped, tag = 'scoped memory for encoder_forward.2']
    %14 = vsyncpa [#allocation3], 0
    // Predicated region
    $region2: #{encoder_forward.2} parent=1 // pred_check
      _
    $region3: #{encoder_forward.2} parent=1 // pred_check_branch
      %16 = sbr.rel (0) target = $region5
    $region4: #{encoder_forward.2} parent=1 // pred_region
      _
    $region5: #{encoder_forward.2} parent=1 // pred_fallthru
      _
    // Predicated region
    $region6: #{encoder_forward.2} parent=1 // pred_check
      _
    $region7: #{encoder_forward.2} parent=1 // pred_check_branch
      %18 = sbr.rel (0) target = $region9
    $region8: #{encoder_forward.2} parent=1 // pred_region
      _
    $region9: #{encoder_forward.2} parent=1 // pred_fallthru
      _
    // Predicated region
    $region10: #{encoder_forward.2} parent=1 // pred_check
      _
    $region11: #{encoder_forward.2} parent=1 // pred_check_branch
      %20 = sbr.rel (0) target = $region13
    $region12: #{encoder_forward.2} parent=1 // pred_region
      _
    $region13: #{encoder_forward.2} parent=1 // pred_fallthru
      _
    // Predicated region
    $region14: #{encoder_forward.2} parent=1 // pred_check
      _
    $region15: #{encoder_forward.2} parent=1 // pred_check_branch
      %22 = sbr.rel (0) target = $region17
    $region16: #{encoder_forward.2} parent=1 // pred_region
      _
    $region17: #{encoder_forward.2} parent=1 // pred_fallthru
      _
    // Predicated region
    $region18: #{encoder_forward.2} parent=1 // pred_check
      _
    $region19: #{encoder_forward.2} parent=1 // pred_check_branch
      %24 = sbr.rel (0) target = $region21
    $region20: #{encoder_forward.2} parent=1 // pred_region
      _
    $region21: #{encoder_forward.2} parent=1 // pred_fallthru
      _
    // Predicated region
    $region22: #{encoder_forward.2} parent=1 // pred_check
      _
    $region23: #{encoder_forward.2} parent=1 // pred_check_branch
      %26 = sbr.rel (0) target = $region25
    $region24: #{encoder_forward.2} parent=1 // pred_region
      _
    $region25: #{encoder_forward.2} parent=1 // pred_fallthru
      _
    // Predicated region
    $region26: #{encoder_forward.2} parent=1 // pred_check
      _
    $region27: #{encoder_forward.2} parent=1 // pred_check_branch
      %28 = sbr.rel (0) target = $region29
    $region28: #{encoder_forward.2} parent=1 // pred_region
      _
    $region29: #{encoder_forward.2} parent=1 // pred_fallthru
      _
    // Predicated region
    $region30: #{encoder_forward.2} parent=1 // pred_check
      _
    $region31: #{encoder_forward.2} parent=1 // pred_check_branch
      %30 = sbr.rel (0) target = $region33
    $region32: #{encoder_forward.2} parent=1 // pred_region
      _
    $region33: #{encoder_forward.2} parent=1 // pred_fallthru
      _
    // Predicated region
    $region34: #{encoder_forward.2} parent=1 // pred_check
      _
    $region35: #{encoder_forward.2} parent=1 // pred_check_branch
      %32 = sbr.rel (0) target = $region37
    $region36: #{encoder_forward.2} parent=1 // pred_region
      _
    $region37: #{encoder_forward.2} parent=1 // pred_fallthru
      _
    %v34 = vld [vmem:[%s0] sm:$0xff]
    %v35 = vpack.c.bf16 %v34, %v34
    %v36 = vld [vmem:[%s1] sm:$0xf]
    %v37 = vld [vmem:[%s1 + $0x4] sm:$0xf]
    %v38 = vld [vmem:[%s2] sm:$0x1]
    %v40 = vlaneseq
    %v41 = vshrl.u32 %v40, 7
    %v42 = vsub.s32 0, %v41
    %v43 = vrot.slane %v38, %v42
    %v47 = vunpack.c.l.b16 %v36
    %v48 = vunpack.c.l.b16 %v37
    %v49 = vpack.c.b16 %v48, %v47
    %vm51 = vcmask 130048
    %v53 = vsel %vm51, %v35, 0
    %55 = vmatprep.subr.bf16.mxu0 0
    %56 = vmatpush1.bf16.msra.mxu0 0
    %57 = vmatprep.subr.bf16.mxu0 0
    %58 = vmatpush1.bf16.msra.mxu0 0
    %59 = vmatprep.subr.bf16.mxu0 0
    %60 = vmatpush1.bf16.msra.mxu0 0
    %61 = vmatprep.subr.bf16.mxu0 0
    %62 = vmatpush1.bf16.msra.mxu0 0
    %63 = vmatprep.subr.bf16.mxu0 0
    %64 = vmatpush1.bf16.msra.mxu0 0
    %65 = vmatprep.subr.bf16.mxu0 0
    %66 = vmatpush1.bf16.msra.mxu0 0
    %67 = vmatprep.subr.bf16.mxu0 0
    %68 = vmatpush1.bf16.msra.mxu0 0
    %69 = vmatprep.subr.bf16.mxu0 0
    %70 = vmatpush1.bf16.msra.mxu0 %v49
    %71 = vmatprep.subr.bf16.mxu0 0
    %72 = vmatpush2.bf16.msra.mxu0 0
    %73 = vmatprep.subr.bf16.mxu0 0
    %74 = vmatpush2.bf16.msra.mxu0 0
    %75 = vmatprep.subr.bf16.mxu0 0
    %76 = vmatpush2.bf16.msra.mxu0 0
    %77 = vmatprep.subr.bf16.mxu0 0
    %78 = vmatpush2.bf16.msra.mxu0 0
    %79 = vmatprep.subr.bf16.mxu0 0
    %80 = vmatpush2.bf16.msra.mxu0 0
    %81 = vmatprep.subr.bf16.mxu0 0
    %82 = vmatpush2.bf16.msra.mxu0 0
    %83 = vmatprep.subr.bf16.mxu0 0
    %84 = vmatpush2.bf16.msra.mxu0 0
    %85 = vmatprep.subr.bf16.mxu0 0
    %86 = vmatpush2.bf16.msra.mxu0 0
    %87 = vmatprep.mubr.bf16.mxu0 0
    %88 = vmatmul.mubr.bf16.gmra.mxu0 %v53
    %v89 = vpop.f32.mrf.mxu0
    %v90 = vadd.f32 %v43, %v89
    %v91 = vpop.f32.mrf.mxu0
    %v92 = vpop.f32.mrf.mxu0
    %v93 = vpop.f32.mrf.mxu0
    %94 = vdwg.mxu0
    %v95 = vmax.f32 %v90, 0.0
    %v96 = vpack.c.bf16 %v95, %v95
    %v97 = vld [vmem:[%s3] sm:$0xf]
    %v98 = vld [vmem:[%s3 + $0x4] sm:$0xf]
    %v99 = vld [vmem:[%s3 + $0x8] sm:$0xf]
    %v100 = vld [vmem:[%s3 + $0xc] sm:$0xf]
    %v101 = vld [vmem:[%s4] sm:$0x1]
    %v103 = vlaneseq
    %v104 = vshrl.u32 %v103, 7
    %v105 = vsub.s32 0, %v104
    %v106 = vrot.slane %v101, %v105
    %v112 = vunpack.c.l.b16 %v97
    %v113 = vunpack.c.l.b16 %v98
    %v114 = vunpack.c.l.b16 %v99
    %v115 = vunpack.c.l.b16 %v100
    %v116 = vpack.c.b16 %v113, %v112
    %v117 = vpack.c.b16 %v115, %v114
    %vm120 = vcmask 261120
    %v122 = vsel %vm120, %v96, 0
    %124 = vmatprep.subr.bf16.mxu0 0
    %125 = vmatpush1.bf16.msra.mxu0 0
    %126 = vmatprep.subr.bf16.mxu0 0
    %127 = vmatpush1.bf16.msra.mxu0 0
    %128 = vmatprep.subr.bf16.mxu0 0
    %129 = vmatpush1.bf16.msra.mxu0 0
    %130 = vmatprep.subr.bf16.mxu0 0
    %131 = vmatpush1.bf16.msra.mxu0 0
    %132 = vmatprep.subr.bf16.mxu0 0
    %133 = vmatpush1.bf16.msra.mxu0 0
    %134 = vmatprep.subr.bf16.mxu0 0
    %135 = vmatpush1.bf16.msra.mxu0 0
    %136 = vmatprep.subr.bf16.mxu0 0
    %137 = vmatpush1.bf16.msra.mxu0 %v117
    %138 = vmatprep.subr.bf16.mxu0 0
    %139 = vmatpush1.bf16.msra.mxu0 %v116
    %140 = vmatprep.subr.bf16.mxu0 0
    %141 = vmatpush2.bf16.msra.mxu0 0
    %142 = vmatprep.subr.bf16.mxu0 0
    %143 = vmatpush2.bf16.msra.mxu0 0
    %144 = vmatprep.subr.bf16.mxu0 0
    %145 = vmatpush2.bf16.msra.mxu0 0
    %146 = vmatprep.subr.bf16.mxu0 0
    %147 = vmatpush2.bf16.msra.mxu0 0
    %148 = vmatprep.subr.bf16.mxu0 0
    %149 = vmatpush2.bf16.msra.mxu0 0
    %150 = vmatprep.subr.bf16.mxu0 0
    %151 = vmatpush2.bf16.msra.mxu0 0
    %152 = vmatprep.subr.bf16.mxu0 0
    %153 = vmatpush2.bf16.msra.mxu0 0
    %154 = vmatprep.subr.bf16.mxu0 0
    %155 = vmatpush2.bf16.msra.mxu0 0
    %156 = vmatprep.mubr.bf16.mxu0 0
    %157 = vmatmul.mubr.bf16.gmra.mxu0 %v122
    %v158 = vpop.f32.mrf.mxu0
    %v159 = vadd.f32 %v106, %v158
    %v160 = vpop.f32.mrf.mxu0
    %v161 = vpop.f32.mrf.mxu0
    %v162 = vpop.f32.mrf.mxu0
    %163 = vdwg.mxu0
    %v164 = vmax.f32 %v159, 0.0
    %v165 = vpack.c.bf16 %v164, %v164
    %v166 = vld [vmem:[%s5] sm:$0xf]
    %v167 = vld [vmem:[%s5 + $0x4] sm:$0xf]
    %v168 = vld [vmem:[%s5 + $0x8] sm:$0xf]
    %v169 = vld [vmem:[%s5 + $0xc] sm:$0xf]
    %v170 = vld [vmem:[%s6] sm:$0x1]
    %v172 = vlaneseq
    %v173 = vshrl.u32 %v172, 7
    %v174 = vsub.s32 0, %v173
    %v175 = vrot.slane %v170, %v174
    %v181 = vunpack.c.l.b16 %v166
    %v182 = vunpack.c.l.b16 %v167
    %v183 = vunpack.c.l.b16 %v168
    %v184 = vunpack.c.l.b16 %v169
    %v185 = vpack.c.b16 %v182, %v181
    %v186 = vpack.c.b16 %v184, %v183
    %v190 = vsel %vm120, %v165, 0
    %192 = vmatprep.subr.bf16.mxu0 0
    %193 = vmatpush1.bf16.msra.mxu0 0
    %194 = vmatprep.subr.bf16.mxu0 0
    %195 = vmatpush1.bf16.msra.mxu0 0
    %196 = vmatprep.subr.bf16.mxu0 0
    %197 = vmatpush1.bf16.msra.mxu0 0
    %198 = vmatprep.subr.bf16.mxu0 0
    %199 = vmatpush1.bf16.msra.mxu0 0
    %200 = vmatprep.subr.bf16.mxu0 0
    %201 = vmatpush1.bf16.msra.mxu0 0
    %202 = vmatprep.subr.bf16.mxu0 0
    %203 = vmatpush1.bf16.msra.mxu0 0
    %204 = vmatprep.subr.bf16.mxu0 0
    %205 = vmatpush1.bf16.msra.mxu0 %v186
    %206 = vmatprep.subr.bf16.mxu0 0
    %207 = vmatpush1.bf16.msra.mxu0 %v185
    %208 = vmatprep.subr.bf16.mxu0 0
    %209 = vmatpush2.bf16.msra.mxu0 0
    %210 = vmatprep.subr.bf16.mxu0 0
    %211 = vmatpush2.bf16.msra.mxu0 0
    %212 = vmatprep.subr.bf16.mxu0 0
    %213 = vmatpush2.bf16.msra.mxu0 0
    %214 = vmatprep.subr.bf16.mxu0 0
    %215 = vmatpush2.bf16.msra.mxu0 0
    %216 = vmatprep.subr.bf16.mxu0 0
    %217 = vmatpush2.bf16.msra.mxu0 0
    %218 = vmatprep.subr.bf16.mxu0 0
    %219 = vmatpush2.bf16.msra.mxu0 0
    %220 = vmatprep.subr.bf16.mxu0 0
    %221 = vmatpush2.bf16.msra.mxu0 0
    %222 = vmatprep.subr.bf16.mxu0 0
    %223 = vmatpush2.bf16.msra.mxu0 0
    %224 = vmatprep.mubr.bf16.mxu0 0
    %225 = vmatmul.mubr.bf16.gmra.mxu0 %v190
    %v226 = vpop.f32.mrf.mxu0
    %v227 = vadd.f32 %v175, %v226
    %v228 = vpop.f32.mrf.mxu0
    %v229 = vpop.f32.mrf.mxu0
    %v230 = vpop.f32.mrf.mxu0
    %231 = vdwg.mxu0
    %v232 = vsel %vm120, %v227, 0.0
    %233 = vadd.xlane.f32.xlu0 %v232
    %v234 = vpop.xlane.xlu0 %233
    %v235 = vrcp.pop 32.0
    %v236 = vmul.f32 %v234, %v235
    %v237 = vsub.f32 %v227, %v236
    %v238 = vmul.f32 %v237, %v237
    %v239 = vsel %vm120, %v238, 0.0
    %240 = vadd.xlane.f32.xlu0 %v239
    %v241 = vpop.xlane.xlu0 %240
    %v242 = vmul.f32 %v241, %v235
    %v243 = vadd.f32 %v242, 1e-05
    %v244 = vrsqrt.pop %v243
    %v245 = vmul.f32 %v237, %v244
    %v246 = vld [vmem:[%s7] sm:$0x1]
    %v248 = vlaneseq
    %v249 = vshrl.u32 %v248, 7
    %v250 = vsub.s32 0, %v249
    %v251 = vrot.slane %v246, %v250
    %v253 = vmul.f32 %v245, %v251
    %v254 = vld [vmem:[%s8] sm:$0x1]
    %v256 = vlaneseq
    %v257 = vshrl.u32 %v256, 7
    %v258 = vsub.s32 0, %v257
    %v259 = vrot.slane %v254, %v258
    %v261 = vadd.f32 %v253, %v259
    %262 = vst.msk [vmem:[#allocation2] sm:$0xff] %vm120, %v261
    // Predicated region
    $region38: #{encoder_forward.2} parent=1 // pred_check
      _
    $region39: #{encoder_forward.2} parent=1 // pred_check_branch
      %264 = sbr.rel (0) target = $region41
    $region40: #{encoder_forward.2} parent=1 // pred_region
      %s266 = ssub.s32 128, 128
      %267 = vsyncadd [#allocation3], %s266
      %s269 = sshll.u32 [#allocation2], 4
      %s270 = int_to_ptr.vmem [resolvable:$true] %s269
      %272 = dma.vmem_to_hbm [thread:$0]  %s270, 128, %s9, [#allocation3]
    $region41: #{encoder_forward.2} parent=1 // pred_fallthru
      _
    // Predicated region
    $region42: #{encoder_forward.2} parent=1 // pred_check
      _
    $region43: #{encoder_forward.2} parent=1 // pred_check_branch
      %274 = sbr.rel (0) target = $region45
    $region44: #{encoder_forward.2} parent=1 // pred_region
      %275 = dma.done [#allocation3], 128
    $region45: #{encoder_forward.2} parent=1 // pred_fallthru
      _
    %276 = vsyncpa [#allocation3], 1

// kernel: encoder_forward.3
$region0: #{encoder_forward.3}
  #allocation0 [shape = 'u32[]', space=smem, size = 0x4, offset = 0x4, fixed_abs, tag = 'smem constant byte address 0x4 - core index']
  #allocation1 [shape = 'u32[144,128]{1,0:T(1,128)}', space=vmem, size = 0x12000, scoped, tag = 'internal scratch']
  %s0 = inlined_call_operand.vmem [shape: f32[16,8], index: 0, kind: input, shape index: {}]
  %s1 = inlined_call_operand.vmem [shape: bf16[8,32], index: 1, kind: input, shape index: {}]
  %s2 = inlined_call_operand.vmem [shape: f32[1,32], index: 2, kind: input, shape index: {}]
  %s3 = inlined_call_operand.vmem [shape: bf16[32,32], index: 3, kind: input, shape index: {}]
  %s4 = inlined_call_operand.vmem [shape: f32[1,32], index: 4, kind: input, shape index: {}]
  %s5 = inlined_call_operand.vmem [shape: bf16[32,32], index: 5, kind: input, shape index: {}]
  %s6 = inlined_call_operand.vmem [shape: f32[1,32], index: 6, kind: input, shape index: {}]
  %s7 = inlined_call_operand.vmem [shape: f32[1,32], index: 7, kind: input, shape index: {}]
  %s8 = inlined_call_operand.vmem [shape: f32[1,32], index: 8, kind: input, shape index: {}]
  %s9 = inlined_call_operand.hbm [shape: f32[16,32], index: 9, kind: output, shape index: {}]
  %s10 = sld [smem:[#allocation0]]
  $region46: #{encoder_forward.3} parent=0
    _
  %s12 = ssub.s32 1, %s10
  %s13 = scalar_select 0, %s12, %s10
  $region1: #{encoder_forward.3} parent=0
    #allocation2 [shape = 'u8[8192]{0}', space=vmem, size = 0x2000, scoped, tag = 'output window, operand 0, single buffered']
    #allocation3 [shape = 's32[1]{0}', space=sflag, size = 0x4, scoped, tag = 'scoped memory for encoder_forward.3']
    %14 = vsyncpa [#allocation3], 0
    // Predicated region
    $region2: #{encoder_forward.3} parent=1 // pred_check
      _
    $region3: #{encoder_forward.3} parent=1 // pred_check_branch
      %16 = sbr.rel (0) target = $region5
    $region4: #{encoder_forward.3} parent=1 // pred_region
      _
    $region5: #{encoder_forward.3} parent=1 // pred_fallthru
      _
    // Predicated region
    $region6: #{encoder_forward.3} parent=1 // pred_check
      _
    $region7: #{encoder_forward.3} parent=1 // pred_check_branch
      %18 = sbr.rel (0) target = $region9
    $region8: #{encoder_forward.3} parent=1 // pred_region
      _
    $region9: #{encoder_forward.3} parent=1 // pred_fallthru
      _
    // Predicated region
    $region10: #{encoder_forward.3} parent=1 // pred_check
      _
    $region11: #{encoder_forward.3} parent=1 // pred_check_branch
      %20 = sbr.rel (0) target = $region13
    $region12: #{encoder_forward.3} parent=1 // pred_region
      _
    $region13: #{encoder_forward.3} parent=1 // pred_fallthru
      _
    // Predicated region
    $region14: #{encoder_forward.3} parent=1 // pred_check
      _
    $region15: #{encoder_forward.3} parent=1 // pred_check_branch
      %22 = sbr.rel (0) target = $region17
    $region16: #{encoder_forward.3} parent=1 // pred_region
      _
    $region17: #{encoder_forward.3} parent=1 // pred_fallthru
      _
    // Predicated region
    $region18: #{encoder_forward.3} parent=1 // pred_check
      _
    $region19: #{encoder_forward.3} parent=1 // pred_check_branch
      %24 = sbr.rel (0) target = $region21
    $region20: #{encoder_forward.3} parent=1 // pred_region
      _
    $region21: #{encoder_forward.3} parent=1 // pred_fallthru
      _
    // Predicated region
    $region22: #{encoder_forward.3} parent=1 // pred_check
      _
    $region23: #{encoder_forward.3} parent=1 // pred_check_branch
      %26 = sbr.rel (0) target = $region25
    $region24: #{encoder_forward.3} parent=1 // pred_region
      _
    $region25: #{encoder_forward.3} parent=1 // pred_fallthru
      _
    // Predicated region
    $region26: #{encoder_forward.3} parent=1 // pred_check
      _
    $region27: #{encoder_forward.3} parent=1 // pred_check_branch
      %28 = sbr.rel (0) target = $region29
    $region28: #{encoder_forward.3} parent=1 // pred_region
      _
    $region29: #{encoder_forward.3} parent=1 // pred_fallthru
      _
    // Predicated region
    $region30: #{encoder_forward.3} parent=1 // pred_check
      _
    $region31: #{encoder_forward.3} parent=1 // pred_check_branch
      %30 = sbr.rel (0) target = $region33
    $region32: #{encoder_forward.3} parent=1 // pred_region
      _
    $region33: #{encoder_forward.3} parent=1 // pred_fallthru
      _
    // Predicated region
    $region34: #{encoder_forward.3} parent=1 // pred_check
      _
    $region35: #{encoder_forward.3} parent=1 // pred_check_branch
      %32 = sbr.rel (0) target = $region37
    $region36: #{encoder_forward.3} parent=1 // pred_region
      _
    $region37: #{encoder_forward.3} parent=1 // pred_fallthru
      _
    %v34 = vld [vmem:[%s0] sm:$0xff]
    %v35 = vld [vmem:[%s0 + $0x8] sm:$0xff]
    %v36 = vpack.c.bf16 %v35, %v34
    %v37 = vld [vmem:[%s1] sm:$0xf]
    %v38 = vld [vmem:[%s2] sm:$0x1]
    %v40 = vlaneseq
    %v41 = vshrl.u32 %v40, 7
    %v42 = vsub.s32 0, %v41
    %v43 = vrot.slane %v38, %v42
    %vm45 = vcmask 64512
    %v47 = vsel %vm45, %v36, 0
    %vm49 = vcmask 1043456
    %v51 = vsel %vm49, %v37, 0
    %53 = vmatprep.subr.bf16.mxu0 0
    %54 = vmatpush1.bf16.msra.mxu0 0
    %55 = vmatprep.subr.bf16.mxu0 0
    %56 = vmatpush1.bf16.msra.mxu0 0
    %57 = vmatprep.subr.bf16.mxu0 0
    %58 = vmatpush1.bf16.msra.mxu0 0
    %59 = vmatprep.subr.bf16.mxu0 0
    %60 = vmatpush1.bf16.msra.mxu0 0
    %61 = vmatprep.subr.bf16.mxu0 0
    %62 = vmatpush1.bf16.msra.mxu0 0
    %63 = vmatprep.subr.bf16.mxu0 0
    %64 = vmatpush1.bf16.msra.mxu0 0
    %65 = vmatprep.subr.bf16.mxu0 0
    %66 = vmatpush1.bf16.msra.mxu0 0
    %67 = vmatprep.subr.bf16.mxu0 0
    %68 = vmatpush1.bf16.msra.mxu0 %v51
    %69 = vmatprep.subr.bf16.mxu0 0
    %70 = vmatpush2.bf16.msra.mxu0 0
    %71 = vmatprep.subr.bf16.mxu0 0
    %72 = vmatpush2.bf16.msra.mxu0 0
    %73 = vmatprep.subr.bf16.mxu0 0
    %74 = vmatpush2.bf16.msra.mxu0 0
    %75 = vmatprep.subr.bf16.mxu0 0
    %76 = vmatpush2.bf16.msra.mxu0 0
    %77 = vmatprep.subr.bf16.mxu0 0
    %78 = vmatpush2.bf16.msra.mxu0 0
    %79 = vmatprep.subr.bf16.mxu0 0
    %80 = vmatpush2.bf16.msra.mxu0 0
    %81 = vmatprep.subr.bf16.mxu0 0
    %82 = vmatpush2.bf16.msra.mxu0 0
    %83 = vmatprep.subr.bf16.mxu0 0
    %84 = vmatpush2.bf16.msra.mxu0 0
    %85 = vmatprep.mubr.bf16.mxu0 0
    %86 = vmatmul.mubr.bf16.gmra.mxu0 %v47
    %v87 = vpop.f32.mrf.mxu0
    %v88 = vadd.f32 %v43, %v87
    %v89 = vpop.f32.mrf.mxu0
    %v90 = vpop.f32.mrf.mxu0
    %v91 = vadd.f32 %v43, %v90
    %v92 = vpop.f32.mrf.mxu0
    %93 = vdwg.mxu0
    %v94 = vmax.f32 %v88, 0.0
    %v95 = vmax.f32 %v91, 0.0
    %v96 = vpack.c.bf16 %v95, %v94
    %v97 = vld [vmem:[%s3] sm:$0xf]
    %v98 = vld [vmem:[%s3 + $0x4] sm:$0xf]
    %v99 = vld [vmem:[%s3 + $0x8] sm:$0xf]
    %v100 = vld [vmem:[%s3 + $0xc] sm:$0xf]
    %v101 = vld [vmem:[%s4] sm:$0x1]
    %v103 = vlaneseq
    %v104 = vshrl.u32 %v103, 7
    %v105 = vsub.s32 0, %v104
    %v106 = vrot.slane %v101, %v105
    %v112 = vunpack.c.l.b16 %v97
    %v113 = vunpack.c.l.b16 %v98
    %v114 = vunpack.c.l.b16 %v99
    %v115 = vunpack.c.l.b16 %v100
    %v116 = vpack.c.b16 %v113, %v112
    %v117 = vpack.c.b16 %v115, %v114
    %vm120 = vcmask 261120
    %v122 = vsel %vm120, %v96, 0
    %124 = vmatprep.subr.bf16.mxu0 0
    %125 = vmatpush1.bf16.msra.mxu0 0
    %126 = vmatprep.subr.bf16.mxu0 0
    %127 = vmatpush1.bf16.msra.mxu0 0
    %128 = vmatprep.subr.bf16.mxu0 0
    %129 = vmatpush1.bf16.msra.mxu0 0
    %130 = vmatprep.subr.bf16.mxu0 0
    %131 = vmatpush1.bf16.msra.mxu0 0
    %132 = vmatprep.subr.bf16.mxu0 0
    %133 = vmatpush1.bf16.msra.mxu0 0
    %134 = vmatprep.subr.bf16.mxu0 0
    %135 = vmatpush1.bf16.msra.mxu0 0
    %136 = vmatprep.subr.bf16.mxu0 0
    %137 = vmatpush1.bf16.msra.mxu0 %v117
    %138 = vmatprep.subr.bf16.mxu0 0
    %139 = vmatpush1.bf16.msra.mxu0 %v116
    %140 = vmatprep.subr.bf16.mxu0 0
    %141 = vmatpush2.bf16.msra.mxu0 0
    %142 = vmatprep.subr.bf16.mxu0 0
    %143 = vmatpush2.bf16.msra.mxu0 0
    %144 = vmatprep.subr.bf16.mxu0 0
    %145 = vmatpush2.bf16.msra.mxu0 0
    %146 = vmatprep.subr.bf16.mxu0 0
    %147 = vmatpush2.bf16.msra.mxu0 0
    %148 = vmatprep.subr.bf16.mxu0 0
    %149 = vmatpush2.bf16.msra.mxu0 0
    %150 = vmatprep.subr.bf16.mxu0 0
    %151 = vmatpush2.bf16.msra.mxu0 0
    %152 = vmatprep.subr.bf16.mxu0 0
    %153 = vmatpush2.bf16.msra.mxu0 0
    %154 = vmatprep.subr.bf16.mxu0 0
    %155 = vmatpush2.bf16.msra.mxu0 0
    %156 = vmatprep.mubr.bf16.mxu0 0
    %157 = vmatmul.mubr.bf16.gmra.mxu0 %v122
    %v158 = vpop.f32.mrf.mxu0
    %v159 = vadd.f32 %v106, %v158
    %v160 = vpop.f32.mrf.mxu0
    %v161 = vpop.f32.mrf.mxu0
    %v162 = vadd.f32 %v106, %v161
    %v163 = vpop.f32.mrf.mxu0
    %164 = vdwg.mxu0
    %v165 = vmax.f32 %v159, 0.0
    %v166 = vmax.f32 %v162, 0.0
    %v167 = vpack.c.bf16 %v166, %v165
    %v168 = vld [vmem:[%s5] sm:$0xf]
    %v169 = vld [vmem:[%s5 + $0x4] sm:$0xf]
    %v170 = vld [vmem:[%s5 + $0x8] sm:$0xf]
    %v171 = vld [vmem:[%s5 + $0xc] sm:$0xf]
    %v172 = vld [vmem:[%s6] sm:$0x1]
    %v174 = vlaneseq
    %v175 = vshrl.u32 %v174, 7
    %v176 = vsub.s32 0, %v175
    %v177 = vrot.slane %v172, %v176
    %v183 = vunpack.c.l.b16 %v168
    %v184 = vunpack.c.l.b16 %v169
    %v185 = vunpack.c.l.b16 %v170
    %v186 = vunpack.c.l.b16 %v171
    %v187 = vpack.c.b16 %v184, %v183
    %v188 = vpack.c.b16 %v186, %v185
    %v192 = vsel %vm120, %v167, 0
    %194 = vmatprep.subr.bf16.mxu0 0
    %195 = vmatpush1.bf16.msra.mxu0 0
    %196 = vmatprep.subr.bf16.mxu0 0
    %197 = vmatpush1.bf16.msra.mxu0 0
    %198 = vmatprep.subr.bf16.mxu0 0
    %199 = vmatpush1.bf16.msra.mxu0 0
    %200 = vmatprep.subr.bf16.mxu0 0
    %201 = vmatpush1.bf16.msra.mxu0 0
    %202 = vmatprep.subr.bf16.mxu0 0
    %203 = vmatpush1.bf16.msra.mxu0 0
    %204 = vmatprep.subr.bf16.mxu0 0
    %205 = vmatpush1.bf16.msra.mxu0 0
    %206 = vmatprep.subr.bf16.mxu0 0
    %207 = vmatpush1.bf16.msra.mxu0 %v188
    %208 = vmatprep.subr.bf16.mxu0 0
    %209 = vmatpush1.bf16.msra.mxu0 %v187
    %210 = vmatprep.subr.bf16.mxu0 0
    %211 = vmatpush2.bf16.msra.mxu0 0
    %212 = vmatprep.subr.bf16.mxu0 0
    %213 = vmatpush2.bf16.msra.mxu0 0
    %214 = vmatprep.subr.bf16.mxu0 0
    %215 = vmatpush2.bf16.msra.mxu0 0
    %216 = vmatprep.subr.bf16.mxu0 0
    %217 = vmatpush2.bf16.msra.mxu0 0
    %218 = vmatprep.subr.bf16.mxu0 0
    %219 = vmatpush2.bf16.msra.mxu0 0
    %220 = vmatprep.subr.bf16.mxu0 0
    %221 = vmatpush2.bf16.msra.mxu0 0
    %222 = vmatprep.subr.bf16.mxu0 0
    %223 = vmatpush2.bf16.msra.mxu0 0
    %224 = vmatprep.subr.bf16.mxu0 0
    %225 = vmatpush2.bf16.msra.mxu0 0
    %226 = vmatprep.mubr.bf16.mxu0 0
    %227 = vmatmul.mubr.bf16.gmra.mxu0 %v192
    %v228 = vpop.f32.mrf.mxu0
    %v229 = vadd.f32 %v177, %v228
    %v230 = vpop.f32.mrf.mxu0
    %v231 = vpop.f32.mrf.mxu0
    %v232 = vadd.f32 %v177, %v231
    %v233 = vpop.f32.mrf.mxu0
    %234 = vdwg.mxu0
    %v235 = vsel %vm120, %v229, 0.0
    %236 = vadd.xlane.f32.xlu0 %v235
    %v237 = vpop.xlane.xlu0 %236
    %v238 = vsel %vm120, %v232, 0.0
    %239 = vadd.xlane.f32.xlu0 %v238
    %v240 = vpop.xlane.xlu0 %239
    %v241 = vrcp.pop 32.0
    %v242 = vmul.f32 %v237, %v241
    %v243 = vmul.f32 %v240, %v241
    %v244 = vsub.f32 %v229, %v242
    %v245 = vsub.f32 %v232, %v243
    %v246 = vmul.f32 %v244, %v244
    %v247 = vmul.f32 %v245, %v245
    %v248 = vsel %vm120, %v246, 0.0
    %249 = vadd.xlane.f32.xlu0 %v248
    %v250 = vpop.xlane.xlu0 %249
    %v251 = vsel %vm120, %v247, 0.0
    %252 = vadd.xlane.f32.xlu0 %v251
    %v253 = vpop.xlane.xlu0 %252
    %v254 = vmul.f32 %v250, %v241
    %v255 = vmul.f32 %v253, %v241
    %v256 = vadd.f32 %v254, 1e-05
    %v257 = vadd.f32 %v255, 1e-05
    %v258 = vrsqrt.pop %v256
    %v259 = vrsqrt.pop %v257
    %v260 = vmul.f32 %v244, %v258
    %v261 = vmul.f32 %v245, %v259
    %v262 = vld [vmem:[%s7] sm:$0x1]
    %v264 = vlaneseq
    %v265 = vshrl.u32 %v264, 7
    %v266 = vsub.s32 0, %v265
    %v267 = vrot.slane %v262, %v266
    %v269 = vmul.f32 %v260, %v267
    %v270 = vmul.f32 %v261, %v267
    %v271 = vld [vmem:[%s8] sm:$0x1]
    %v273 = vlaneseq
    %v274 = vshrl.u32 %v273, 7
    %v275 = vsub.s32 0, %v274
    %v276 = vrot.slane %v271, %v275
    %v278 = vadd.f32 %v269, %v276
    %v279 = vadd.f32 %v270, %v276
    %280 = vst.msk [vmem:[#allocation2] sm:$0xff] %vm120, %v278
    %281 = vst.msk [vmem:[#allocation2 + $0x8] sm:$0xff] %vm120, %v279
    // Predicated region
    $region38: #{encoder_forward.3} parent=1 // pred_check
      _
    $region39: #{encoder_forward.3} parent=1 // pred_check_branch
      %283 = sbr.rel (0) target = $region41
    $region40: #{encoder_forward.3} parent=1 // pred_region
      %s285 = ssub.s32 256, 256
      %286 = vsyncadd [#allocation3], %s285
      %s287 = sshll.u32 [#allocation2], 4
      %s288 = int_to_ptr.vmem [resolvable:$true] %s287
      %293 = dma.vmem_to_hbm [thread:$0]  %s288, 256, %s9, [#allocation3], 128, 128, 8
    $region41: #{encoder_forward.3} parent=1 // pred_fallthru
      _
    // Predicated region
    $region42: #{encoder_forward.3} parent=1 // pred_check
      _
    $region43: #{encoder_forward.3} parent=1 // pred_check_branch
      %295 = sbr.rel (0) target = $region45
    $region44: #{encoder_forward.3} parent=1 // pred_region
      %296 = dma.done [#allocation3], 256
    $region45: #{encoder_forward.3} parent=1 // pred_fallthru
      _
    %297 = vsyncpa [#allocation3], 1

</llo_original>
